<compile_context>
chip_gen: v7x
topology: tpu7x:2x2x1
jax: 0.10.0
libtpu: 0.0.40
codegen_flags: <defaults>
</compile_context>

<pallas_src>
import functools

import jax
import jax.numpy as jnp
from jax.experimental import pallas as pl
from jax.experimental.pallas import tpu as pltpu

_N_BISECT = 30  # interval shrinks by 2^30 -> far below f32 eps for the nu bracket


def _lowloss_kernel(logits_ref, tgt_ref, loss_ref, w_ref, *, n, c, lamb, n_bisect):
    x = logits_ref[...]                                   # (n, c) f32, classes on lanes
    tgt = tgt_ref[...]                                    # (n, 1) int32

    # one-hot(target) without a gather: compare against a lane iota.
    col = jax.lax.broadcasted_iota(jnp.int32, (n, c), 1)
    onehot = (col == tgt).astype(jnp.float32)             # (n, c)

    # Numerically stable per-sample cross entropy (1 exp + 1 log per row on the EUP).
    m = jnp.max(x, axis=1, keepdims=True)                 # (n, 1)
    z = x - m
    ez = jnp.exp(z)                                       # (n, c)
    s = jnp.sum(ez, axis=1, keepdims=True)                # (n, 1)
    lse = jnp.log(s) + m                                  # (n, 1)
    tgt_logit = jnp.sum(x * onehot, axis=1, keepdims=True)
    ce = lse - tgt_logit                                  # (n, 1)

    # Analytic autograd of mean(ce) wrt the (detached) logits.
    p = ez / s                                            # softmax, (n, c)
    diff = (p - onehot) * jnp.float32(1.0 / n)            # per-sample gradient rows
    gsq = jnp.sum(diff * diff, axis=1, keepdims=True)     # ||grad_i||_2^2 (no sqrt)

    a = gsq + jnp.float32(lamb)                           # (n, 1)

    # QP weights via KKT water-filling: w_i = max(0, (a_i - nu)/(2*lamb)), sum w = n.
    two_lamb = jnp.float32(2.0 * lamb)
    inv_two_lamb = jnp.float32(1.0 / (2.0 * lamb))
    n_f = jnp.float32(n)

    a_max = jnp.max(a, axis=0, keepdims=True)             # (1, 1)
    lo0 = a_max - two_lamb * n_f                          # f(lo0) >= n  (bracket low)
    hi0 = a_max                                           # f(hi0) == 0 <= n (bracket high)

    def body(_, carry):
        lo, hi = carry                                    # (1, 1) each
        mid = 0.5 * (lo + hi)
        wsum = jnp.sum(jnp.maximum(a - mid, 0.0), axis=0, keepdims=True) * inv_two_lamb
        too_big = wsum > n_f                              # (1, 1) bool
        return jnp.where(too_big, mid, lo), jnp.where(too_big, hi, mid)

    lo, hi = jax.lax.fori_loop(0, n_bisect, body, (lo0, hi0))
    nu = 0.5 * (lo + hi)                                  # (1, 1)

    w = jnp.maximum(a - nu, 0.0) * inv_two_lamb           # (n, 1), w >= 0, sum ~= n
    w_ref[...] = w
    loss_ref[...] = jnp.sum(ce * w, axis=0, keepdims=True) * jnp.float32(1.0 / n)


def low_loss_forward(logits, target, lamb=0.1, n_bisect=_N_BISECT):
    """Pallas equivalent of LOWLoss.forward. Returns (scalar loss, weights (N,))."""
    assert lamb > 0.0
    n, c = logits.shape
    logits32 = logits.astype(jnp.float32)
    tgt = target.astype(jnp.int32).reshape(n, 1)

    kernel = functools.partial(
        _lowloss_kernel, n=n, c=c, lamb=float(lamb), n_bisect=int(n_bisect)
    )

    loss, w = pl.pallas_call(
        kernel,
        out_shape=(
            jax.ShapeDtypeStruct((1, 1), jnp.float32),    # weighted mean loss
            jax.ShapeDtypeStruct((n, 1), jnp.float32),    # per-sample QP weights
        ),
        in_specs=[
            pl.BlockSpec(memory_space=pltpu.MemorySpace.VMEM),   # logits (n, c)
            pl.BlockSpec(memory_space=pltpu.MemorySpace.VMEM),   # target (n, 1) int32
        ],
        out_specs=(
            pl.BlockSpec(memory_space=pltpu.MemorySpace.VMEM),
            pl.BlockSpec(memory_space=pltpu.MemorySpace.VMEM),
        ),
    )(logits32, tgt)

    return loss[0, 0], w.reshape(n)


def _reference(logits, target, lamb):
    """Pure-JAX reference (same exact-QP semantics) for a sanity check."""
    logits = jnp.asarray(logits, jnp.float32)
    n, c = logits.shape
    lse = jax.nn.logsumexp(logits, axis=1)
    tgt_logit = jnp.take_along_axis(logits, target[:, None], axis=1)[:, 0]
    ce = lse - tgt_logit
    p = jax.nn.softmax(logits, axis=1)
    onehot = jax.nn.one_hot(target, c, dtype=jnp.float32)
    g = jnp.linalg.norm((p - onehot) / n, axis=1)
    a = g * g + lamb
    lo = jnp.max(a) - 2.0 * lamb * n
    hi = jnp.max(a)
    for _ in range(60):
        mid = 0.5 * (lo + hi)
        s = jnp.sum(jnp.maximum(a - mid, 0.0)) / (2.0 * lamb)
        lo = jnp.where(s > n, mid, lo)
        hi = jnp.where(s > n, hi, mid)
    nu = 0.5 * (lo + hi)
    w = jnp.maximum(a - nu, 0.0) / (2.0 * lamb)
    return jnp.sum(ce * w) / n, w


if __name__ == "__main__":
    key = jax.random.PRNGKey(0)
    k1, k2 = jax.random.split(key)
    N, C = 8, 10                                  # small batch of 10-class logits
    logits = 2.0 * jax.random.normal(k1, (N, C), dtype=jnp.float32)
    target = jax.random.randint(k2, (N,), 0, C, dtype=jnp.int32)

    loss, weights = low_loss_forward(logits, target, lamb=0.1)
    jax.block_until_ready((loss, weights))

    # Well-formedness.
    assert loss.shape == ()
    assert weights.shape == (N,)
    assert bool(jnp.isfinite(loss))
    assert bool(jnp.all(jnp.isfinite(weights)))

    # QP feasibility of the returned weights: w >= 0 and sum(w) == N.
    assert bool(jnp.all(weights >= 0.0))
    assert bool(jnp.abs(jnp.sum(weights) - N) < 1e-2)

    # Match the pure-JAX reference.
    ref_loss, ref_w = _reference(logits, target, lamb=0.1)
    assert bool(jnp.allclose(loss, ref_loss, rtol=2e-3, atol=2e-3))
    assert bool(jnp.allclose(weights, ref_w, rtol=2e-3, atol=2e-3))

    print("KERNEL_OK")
</pallas_src>

<mosaic_0001>
module attributes {stable_mosaic.version = 11 : i64} {
  func.func @_lowloss_kernel(%arg0: memref<8x10xf32, #tpu.memory_space<vmem>>, %arg1: memref<8x1xi32, #tpu.memory_space<vmem>>, %arg2: memref<1x1xf32, #tpu.memory_space<vmem>>, %arg3: memref<8x1xf32, #tpu.memory_space<vmem>>) attributes {dimension_semantics = [], scalar_prefetch = 0 : i64, scratch_operands = 0 : i64, tpu.core_type = #tpu.core_type<tc>} {
    %c0 = arith.constant 0 : index
    %c0_0 = arith.constant 0 : index
    %0 = vector.load %arg0[%c0, %c0_0] : memref<8x10xf32, #tpu.memory_space<vmem>>, vector<8x10xf32>
    %c0_1 = arith.constant 0 : index
    %c0_2 = arith.constant 0 : index
    %1 = vector.load %arg1[%c0_1, %c0_2] : memref<8x1xi32, #tpu.memory_space<vmem>>, vector<8x1xi32>
    %2 = tpu.iota {dimensions = array<i32: 1>} : vector<8x10xi32>
    %3 = vector.broadcast %1 : vector<8x1xi32> to vector<8x10xi32>
    %4 = arith.cmpi eq, %2, %3 : vector<8x10xi32>
    %5 = arith.extui %4 : vector<8x10xi1> to vector<8x10xi32>
    %6 = arith.sitofp %5 : vector<8x10xi32> to vector<8x10xf32>
    %cst = arith.constant dense<0xFF800000> : vector<8xf32>
    %7 = vector.multi_reduction <maximumf>, %0, %cst [1] : vector<8x10xf32> to vector<8xf32>
    %8 = vector.shape_cast %7 : vector<8xf32> to vector<8x1xf32>
    %9 = vector.broadcast %8 : vector<8x1xf32> to vector<8x10xf32>
    %10 = arith.subf %0, %9 : vector<8x10xf32>
    %11 = math.exp %10 : vector<8x10xf32>
    %cst_3 = arith.constant dense<0.000000e+00> : vector<8xf32>
    %12 = vector.multi_reduction <add>, %11, %cst_3 [1] : vector<8x10xf32> to vector<8xf32>
    %13 = vector.shape_cast %12 : vector<8xf32> to vector<8x1xf32>
    %14 = math.log %13 : vector<8x1xf32>
    %15 = arith.addf %14, %8 : vector<8x1xf32>
    %16 = arith.mulf %0, %6 : vector<8x10xf32>
    %cst_4 = arith.constant dense<0.000000e+00> : vector<8xf32>
    %17 = vector.multi_reduction <add>, %16, %cst_4 [1] : vector<8x10xf32> to vector<8xf32>
    %18 = vector.shape_cast %17 : vector<8xf32> to vector<8x1xf32>
    %19 = arith.subf %15, %18 : vector<8x1xf32>
    %20 = vector.broadcast %13 : vector<8x1xf32> to vector<8x10xf32>
    %21 = arith.divf %11, %20 : vector<8x10xf32>
    %22 = arith.subf %21, %6 : vector<8x10xf32>
    %cst_5 = arith.constant 1.250000e-01 : f32
    %23 = vector.broadcast %cst_5 : f32 to vector<8x10xf32>
    %24 = arith.mulf %22, %23 : vector<8x10xf32>
    %25 = arith.mulf %24, %24 : vector<8x10xf32>
    %cst_6 = arith.constant dense<0.000000e+00> : vector<8xf32>
    %26 = vector.multi_reduction <add>, %25, %cst_6 [1] : vector<8x10xf32> to vector<8xf32>
    %27 = vector.shape_cast %26 : vector<8xf32> to vector<8x1xf32>
    %cst_7 = arith.constant 1.000000e-01 : f32
    %28 = vector.broadcast %cst_7 : f32 to vector<8x1xf32>
    %29 = arith.addf %27, %28 : vector<8x1xf32>
    %cst_8 = arith.constant dense<0xFF800000> : vector<1xf32>
    %30 = vector.multi_reduction <maximumf>, %29, %cst_8 [0] : vector<8x1xf32> to vector<1xf32>
    %31 = vector.shape_cast %30 : vector<1xf32> to vector<1x1xf32>
    %cst_9 = arith.constant 2.000000e-01 : f32
    %cst_10 = arith.constant 8.000000e+00 : f32
    %32 = arith.mulf %cst_9, %cst_10 : f32
    %33 = vector.broadcast %32 : f32 to vector<1x1xf32>
    %34 = arith.subf %31, %33 : vector<1x1xf32>
    %cst_11 = arith.constant 5.000000e+00 : f32
    %cst_12 = arith.constant 8.000000e+00 : f32
    %c0_i32 = arith.constant 0 : i32
    %c30_i32 = arith.constant 30 : i32
    %35 = arith.addi %c0_i32, %c30_i32 : i32
    %c1_i32 = arith.constant 1 : i32
    %36:2 = scf.for %arg4 = %c0_i32 to %35 step %c1_i32 iter_args(%arg5 = %34, %arg6 = %31) -> (vector<1x1xf32>, vector<1x1xf32>)  : i32 {
      %53 = arith.addf %arg5, %arg6 : vector<1x1xf32>
      %cst_22 = arith.constant 5.000000e-01 : f32
      %54 = vector.broadcast %cst_22 : f32 to vector<1x1xf32>
      %55 = arith.mulf %54, %53 : vector<1x1xf32>
      %56 = vector.broadcast %55 : vector<1x1xf32> to vector<8x1xf32>
      %57 = arith.subf %29, %56 : vector<8x1xf32>
      %cst_23 = arith.constant 0.000000e+00 : f32
      %58 = vector.broadcast %cst_23 : f32 to vector<8x1xf32>
      %59 = arith.maximumf %57, %58 : vector<8x1xf32>
      %cst_24 = arith.constant dense<0.000000e+00> : vector<1xf32>
      %60 = vector.multi_reduction <add>, %59, %cst_24 [0] : vector<8x1xf32> to vector<1xf32>
      %61 = vector.shape_cast %60 : vector<1xf32> to vector<1x1xf32>
      %62 = vector.broadcast %cst_11 : f32 to vector<1x1xf32>
      %63 = arith.mulf %61, %62 : vector<1x1xf32>
      %64 = vector.broadcast %cst_12 : f32 to vector<1x1xf32>
      %65 = arith.cmpf ogt, %63, %64 : vector<1x1xf32>
      %66 = arith.select %65, %55, %arg5 : vector<1x1xi1>, vector<1x1xf32>
      %67 = arith.select %65, %arg6, %55 : vector<1x1xi1>, vector<1x1xf32>
      scf.yield %66, %67 : vector<1x1xf32>, vector<1x1xf32>
    }
    %37 = arith.addf %36#0, %36#1 : vector<1x1xf32>
    %cst_13 = arith.constant 5.000000e-01 : f32
    %38 = vector.broadcast %cst_13 : f32 to vector<1x1xf32>
    %39 = arith.mulf %38, %37 : vector<1x1xf32>
    %40 = vector.broadcast %39 : vector<1x1xf32> to vector<8x1xf32>
    %41 = arith.subf %29, %40 : vector<8x1xf32>
    %cst_14 = arith.constant 0.000000e+00 : f32
    %42 = vector.broadcast %cst_14 : f32 to vector<8x1xf32>
    %43 = arith.maximumf %41, %42 : vector<8x1xf32>
    %cst_15 = arith.constant 5.000000e+00 : f32
    %44 = vector.broadcast %cst_15 : f32 to vector<8x1xf32>
    %45 = arith.mulf %43, %44 : vector<8x1xf32>
    %c0_16 = arith.constant 0 : index
    %c0_17 = arith.constant 0 : index
    %46 = vector.load %arg3[%c0_16, %c0_17] : memref<8x1xf32, #tpu.memory_space<vmem>>, vector<8x1xf32>
    tpu.vector_store %arg3[%c0_16, %c0_17], %45 {strides = array<i32>} : memref<8x1xf32, #tpu.memory_space<vmem>>, vector<8x1xf32>,
    %47 = arith.mulf %19, %45 : vector<8x1xf32>
    %cst_18 = arith.constant dense<0.000000e+00> : vector<1xf32>
    %48 = vector.multi_reduction <add>, %47, %cst_18 [0] : vector<8x1xf32> to vector<1xf32>
    %49 = vector.shape_cast %48 : vector<1xf32> to vector<1x1xf32>
    %cst_19 = arith.constant 1.250000e-01 : f32
    %50 = vector.broadcast %cst_19 : f32 to vector<1x1xf32>
    %51 = arith.mulf %49, %50 : vector<1x1xf32>
    %c0_20 = arith.constant 0 : index
    %c0_21 = arith.constant 0 : index
    %52 = vector.load %arg2[%c0_20, %c0_21] : memref<1x1xf32, #tpu.memory_space<vmem>>, vector<1x1xf32>
    tpu.vector_store %arg2[%c0_20, %c0_21], %51 {strides = array<i32>} : memref<1x1xf32, #tpu.memory_space<vmem>>, vector<1x1xf32>,
    return
  }
}

</mosaic_0001>

<llo_original>
// kernel: tpu_custom_call.1
$region0: #{tpu_custom_call.1}
  #allocation0 [shape = 'u32[]', space=smem, size = 0x4, offset = 0x4, fixed_abs, tag = 'smem constant byte address 0x4 - core index']
  #allocation1 [shape = 'u32[144,128]{1,0:T(1,128)}', space=vmem, size = 0x12000, scoped, tag = 'internal scratch']
  %s0 = inlined_call_operand.vmem [shape: f32[8,10], index: 0, kind: input, shape index: {}]
  %s1 = inlined_call_operand.vmem [shape: s32[8,1], index: 1, kind: input, shape index: {}]
  %s2 = inlined_call_operand.hbm [shape: f32[1,1], index: 2, kind: output, shape index: {0}]
  %s3 = inlined_call_operand.vmem [shape: f32[8,1], index: 3, kind: output, shape index: {1}]
  %4 = xla_tuple %s2, %s3
  %s5 = sld [smem:[#allocation0]]
  $region33: #{tpu_custom_call.1} parent=0
    _
  %s7 = ssub.s32 1, %s5
  %s8 = scalar_select 0, %s7, %s5
  $region1: #{tpu_custom_call.1} parent=0
    #allocation2 [shape = 'u8[512]{0}', space=vmem, size = 0x400, scoped, tag = 'output window, operand 0, single buffered']
    #allocation3 [shape = 's32[1]{0}', space=sflag, size = 0x4, scoped, tag = 'scoped memory for tpu_custom_call.1']
    %9 = vsyncpa [#allocation3], 0
    // Predicated region
    $region2: #{tpu_custom_call.1} parent=1 // pred_check
      _
    $region3: #{tpu_custom_call.1} parent=1 // pred_check_branch
      %11 = sbr.rel (0) target = $region5
    $region4: #{tpu_custom_call.1} parent=1 // pred_region
      _
    $region5: #{tpu_custom_call.1} parent=1 // pred_fallthru
      _
    // Predicated region
    $region6: #{tpu_custom_call.1} parent=1 // pred_check
      _
    $region7: #{tpu_custom_call.1} parent=1 // pred_check_branch
      %13 = sbr.rel (0) target = $region9
    $region8: #{tpu_custom_call.1} parent=1 // pred_region
      _
    $region9: #{tpu_custom_call.1} parent=1 // pred_fallthru
      _
    %v14 = vld [vmem:[%s0] sm:$0xff]
    %v15 = vld [vmem:[%s1] sm:$0xff]
    %v16 = vlaneseq
    %v17 = vand.u32 %v16, 127
    %18 = vset.pattern.permute.xlu0 0
    %19 = vperm.xlu0 %18, %v15
    %v20 = vpop.permute.xlu0 %19
    %vm21 = vcmp.eq.s32.totalorder %v17, %v20
    %v22 = vsel %vm21, 1, 0
    %v23 = vcvt.s32.f32 %v22
    %vm24 = vcmask 80896
    %v25 = vsel %vm24, %v14, -inf
    %26 = vmax.xlane.f32.xlu0 %v25
    %v27 = vpop.xlane.xlu0 %26
    %v28 = vsub.f32 %v14, %v27
    %v29 = vmul.f32 %v28, 1.442695
    %v30 = vpow.pop %v29
    %v31 = vsel %vm24, %v30, 0.0
    %32 = vadd.xlane.f32.xlu0 %v31
    %v33 = vpop.xlane.xlu0 %32
    %v34 = vlog2.pop %v33
    %v35 = vmul.f32 %v34, 0.6931472
    %v36 = vadd.f32 %v35, %v27
    %v37 = vmul.f32 %v14, %v23
    %v38 = vsel %vm24, %v37, 0.0
    %39 = vadd.xlane.f32.xlu0 %v38
    %v40 = vpop.xlane.xlu0 %39
    %v41 = vsub.f32 %v36, %v40
    %v42 = vrcp.pop %v33
    %v43 = vmul.f32 %v30, %v42
    %v44 = vsub.f32 %v43, %v23
    %v45 = vmul.f32 %v44, 0.125
    %v46 = vmul.f32 %v45, %v45
    %v47 = vsel %vm24, %v46, 0.0
    %48 = vadd.xlane.f32.xlu0 %v47
    %v49 = vpop.xlane.xlu0 %48
    %v50 = vadd.f32 %v49, 0.1
    %v51 = vrot.slane %v50, 4
    %v52 = vmax.f32 %v50, %v51
    %v53 = vrot.slane %v52, 2
    %v54 = vmax.f32 %v52, %v53
    %v55 = vrot.slane %v54, 1
    %v56 = vmax.f32 %v54, %v55
    %v57 = vsub.f32 %v56, 1.6
    loop: start=0, step=1, limit=30
    $region10: #{tpu_custom_call.1} parent=1 // loop_pre_header
      _
    $region11: #{tpu_custom_call.1} parent=1 // loop_header
      %s59 = sphi 0, %s63
      %p60 = scmp.ge.s32.totalorder %s59, 30
      %v64 = vphi %v57, %v78
      %v65 = vphi %v56, %v79
    $region12: #{tpu_custom_call.1} parent=1 // loop_header_branch
      %62 = sbr.rel (%p60) target = $region16
    $region13: #{tpu_custom_call.1} parent=1 // loop_body
      %v66 = vadd.f32 %v64, %v65
      %v67 = vmul.f32 %v66, 0.5
      %v68 = vsub.f32 %v50, %v67
      %v69 = vmax.f32 %v68, 0.0
      %v70 = vrot.slane %v69, 4
      %v71 = vadd.f32 %v69, %v70
      %v72 = vrot.slane %v71, 2
      %v73 = vadd.f32 %v71, %v72
      %v74 = vrot.slane %v73, 1
      %v75 = vadd.f32 %v73, %v74
      %v76 = vmul.f32 %v75, 5.0
      %vm77 = vcmp.gt.f32.partialorder %v76, 8.0
      %v78 = vsel %vm77, %v67, %v64
      %v79 = vsel %vm77, %v65, %v67
    $region14: #{tpu_custom_call.1} parent=1 // loop_footer
      %s63 = sadd.s32 1, %s59
    $region15: #{tpu_custom_call.1} parent=1 // loop_footer_branch
      %58 = sbr.rel target = $region11
    $region16: #{tpu_custom_call.1} parent=1 // loop_exit
      _
    %v80 = vadd.f32 %v64, %v65
    %v81 = vmul.f32 %v80, 0.5
    %v82 = vsub.f32 %v50, %v81
    %v83 = vmax.f32 %v82, 0.0
    %v84 = vmul.f32 %v83, 5.0
    %vm85 = vcmask 7168
    %86 = vst.msk [vmem:[%s3] sm:$0xff] %vm85, %v84
    %v87 = vmul.f32 %v41, %v84
    %v88 = vrot.slane %v87, 4
    %v89 = vadd.f32 %v87, %v88
    %v90 = vrot.slane %v89, 2
    %v91 = vadd.f32 %v89, %v90
    %v92 = vrot.slane %v91, 1
    %v93 = vadd.f32 %v91, %v92
    %v94 = vmul.f32 %v93, 0.125
    %vm95 = vcmask 0
    %96 = vst.msk [vmem:[#allocation2] sm:$0x1] %vm95, %v94
    // Predicated region
    $region17: #{tpu_custom_call.1} parent=1 // pred_check
      _
    $region18: #{tpu_custom_call.1} parent=1 // pred_check_branch
      %98 = sbr.rel (0) target = $region20
    $region19: #{tpu_custom_call.1} parent=1 // pred_region
      %s100 = ssub.s32 16, 16
      %101 = vsyncadd [#allocation3], %s100
      %s103 = sshll.u32 [#allocation2], 4
      %s104 = int_to_ptr.vmem [resolvable:$true] %s103
      %106 = dma.vmem_to_hbm [thread:$0]  %s104, 16, %s2, [#allocation3]
    $region20: #{tpu_custom_call.1} parent=1 // pred_fallthru
      _
    // Predicated region
    $region21: #{tpu_custom_call.1} parent=1 // pred_check
      _
    $region22: #{tpu_custom_call.1} parent=1 // pred_check_branch
      %108 = sbr.rel (0) target = $region24
    $region23: #{tpu_custom_call.1} parent=1 // pred_region
      _
    $region24: #{tpu_custom_call.1} parent=1 // pred_fallthru
      _
    // Predicated region
    $region25: #{tpu_custom_call.1} parent=1 // pred_check
      _
    $region26: #{tpu_custom_call.1} parent=1 // pred_check_branch
      %110 = sbr.rel (0) target = $region28
    $region27: #{tpu_custom_call.1} parent=1 // pred_region
      %111 = dma.done [#allocation3], 16
    $region28: #{tpu_custom_call.1} parent=1 // pred_fallthru
      _
    // Predicated region
    $region29: #{tpu_custom_call.1} parent=1 // pred_check
      _
    $region30: #{tpu_custom_call.1} parent=1 // pred_check_branch
      %113 = sbr.rel (0) target = $region32
    $region31: #{tpu_custom_call.1} parent=1 // pred_region
      _
    $region32: #{tpu_custom_call.1} parent=1 // pred_fallthru
      _
    %114 = vsyncpa [#allocation3], 1

</llo_original>
